<compile_context>
chip_gen: v5e
topology: v5e:2x2
jax: 0.10.0
libtpu: 0.0.40
codegen_flags: <defaults>
</compile_context>

<pallas_src>
import numpy as np
import jax
import jax.numpy as jnp
from jax.experimental import pallas as pl
from jax.experimental.pallas import tpu as pltpu

# ----------------- small config consistent with the module -----------------
N_CLS = 3           # len(classnames)
N_CTX = 4           # cfg.TRAINER.PRODA.N_CTX
CTX_DIM = 32        # clip_model.ln_final.weight.shape[0]
SEQ_LEN = 16        # CLIP context length (77 in real CLIP)
N_PROMPT = 4        # cfg.TRAINER.PRODA.N_PROMPT
PROMPT_BS = 4       # cfg.TRAINER.PRODA.PROMPT_BS  -> n_iter == 1
SUF_LEN = SEQ_LEN - 1 - N_CTX
HALF_N_CTX = N_CTX // 2
DTYPE = jnp.float32


def _prompt_order(pos):
    # torch forward: prompts_end (pos==2) first, then middle (1), then front (0)
    return np.concatenate([np.where(pos == v)[0] for v in (2, 1, 0)]).astype(np.int32)


# --------------------------- Pallas kernel ----------------------------------
def make_prompt_kernel(pos, name_lens):
    """Fused prompt-assembly kernel, specialized on the pos / name_lens buffers
    exactly as PromptLearner.__init__ fixes them."""
    pos = np.asarray(pos)
    name_lens = [int(v) for v in np.asarray(name_lens)]
    # VMEM refs have no runtime bounds check -> guard the static slices here.
    assert all(0 < nl <= SUF_LEN for nl in name_lens), \
        f"name_lens must be in (0, {SUF_LEN}]"
    assert len(name_lens) == N_CLS and len(pos) == N_PROMPT
    order = _prompt_order(pos)
    h = HALF_N_CTX

    def kernel(prefix_ref, suffix_ref, ctx_ref, nc_prefix_ref, nc_suffix_ref,
               tok_in_ref, nc_tok_in_ref,
               prompts_ref, tok_ref, nc_ref, nc_tok_ref):
        # ---- hoist every ref load: one vld per input, slice values after ----
        prefix_all = prefix_ref[...]        # (N_CLS, 1, CTX_DIM)
        suffix_all = suffix_ref[...]        # (N_CLS, SUF_LEN, CTX_DIM)
        ctx_all = ctx_ref[...]              # (N_PROMPT, N_CTX, CTX_DIM)
        nc_prefix = nc_prefix_ref[...]      # (1, 1, CTX_DIM)
        nc_suffix = nc_suffix_ref[...]      # (1, SUF_LEN, CTX_DIM)
        tok_all = tok_in_ref[...]           # (N_CLS, SEQ_LEN) int32
        nc_tok_in = nc_tok_in_ref[...]      # (1, SEQ_LEN) int32

        # -------- prompts: (N_CLS*N_PROMPT, SEQ_LEN, CTX_DIM), one store per tile
        for ci in range(N_CLS):
            nl = name_lens[ci]
            prefix_c = prefix_all[ci]               # (1, CTX_DIM)
            suffix_c = suffix_all[ci]               # (SUF_LEN, CTX_DIM)
            name_c = suffix_c[:nl]                  # (nl, CTX_DIM)
            rest_c = suffix_c[nl:] if nl < SUF_LEN else None
            for slot in range(N_PROMPT):
                p = int(order[slot])
                pv = int(pos[p])
                ctx_p = ctx_all[p]                  # (N_CTX, CTX_DIM)
                if pv == 2:        # end: [prefix, ctx, suffix]
                    parts = [prefix_c, ctx_p, suffix_c]
                elif pv == 1:      # middle: [prefix, ctx[:h], name, ctx[h:], rest]
                    parts = [prefix_c, ctx_p[:h], name_c, ctx_p[h:]]
                    if rest_c is not None:
                        parts.append(rest_c)
                else:              # front: [prefix, name, ctx, rest]
                    parts = [prefix_c, name_c, ctx_p]
                    if rest_c is not None:
                        parts.append(rest_c)
                tile = jnp.concatenate(parts, axis=0)        # (SEQ_LEN, CTX_DIM)
                prompts_ref[ci * N_PROMPT + slot] = tile

        # -------- repeated tokenized prompts (fold jnp.tile into the kernel) --
        for ci in range(N_CLS):
            tok_ref[ci * N_PROMPT:(ci + 1) * N_PROMPT, :] = jnp.broadcast_to(
                tok_all[ci:ci + 1, :], (N_PROMPT, SEQ_LEN))
        nc_tok_ref[...] = jnp.broadcast_to(nc_tok_in, (N_PROMPT, SEQ_LEN))

        # -------- nc_prompts (only_prefix): three wide stores ------------------
        nc_ref[:, 0:1, :] = jnp.broadcast_to(nc_prefix, (N_PROMPT, 1, CTX_DIM))
        nc_ref[:, 1:1 + N_CTX, :] = ctx_all
        nc_ref[:, 1 + N_CTX:, :] = jnp.broadcast_to(
            nc_suffix, (N_PROMPT, SUF_LEN, CTX_DIM))

    return kernel


# ------------------------------ wrapper --------------------------------------
def prompt_learner_forward(token_prefix, token_suffix, ctx,
                           nc_token_prefix, nc_token_suffix,
                           tokenized_prompts, nc_tokenized_prompts,
                           pos, name_lens):
    """Equivalent of PromptLearner.forward(infer=False), n_iter == 1 branch."""
    kernel = make_prompt_kernel(pos, name_lens)
    vmem = pl.BlockSpec(memory_space=pltpu.MemorySpace.VMEM)
    prompts, tok, nc_prompts, nc_tok = pl.pallas_call(
        kernel,
        out_shape=(
            jax.ShapeDtypeStruct((N_CLS * N_PROMPT, SEQ_LEN, CTX_DIM), DTYPE),
            jax.ShapeDtypeStruct((N_CLS * N_PROMPT, SEQ_LEN), jnp.int32),
            jax.ShapeDtypeStruct((N_PROMPT, SEQ_LEN, CTX_DIM), DTYPE),
            jax.ShapeDtypeStruct((N_PROMPT, SEQ_LEN), jnp.int32),
        ),
        in_specs=[vmem] * 7,
        out_specs=(vmem, vmem, vmem, vmem),
    )(token_prefix, token_suffix, ctx, nc_token_prefix, nc_token_suffix,
      tokenized_prompts, nc_tokenized_prompts)
    return prompts, tok, nc_prompts, nc_tok


# -------------------- numpy reference of the torch semantics -----------------
def _perm_indices(pos_val, name_len):
    pre = [0]
    ctx_rows = list(range(1, 1 + N_CTX))
    suf_rows = list(range(1 + N_CTX, SEQ_LEN))
    if pos_val == 2:        # end
        idx = pre + ctx_rows + suf_rows
    elif pos_val == 1:      # middle
        idx = (pre + ctx_rows[:HALF_N_CTX] + suf_rows[:name_len]
               + ctx_rows[HALF_N_CTX:] + suf_rows[name_len:])
    else:                   # front
        idx = pre + suf_rows[:name_len] + ctx_rows + suf_rows[name_len:]
    return np.asarray(idx, dtype=np.int32)


def reference_prompts(ctx, pos, prefix, suffix, name_lens):
    ctx, prefix, suffix = map(np.asarray, (ctx, prefix, suffix))
    order = _prompt_order(np.asarray(pos))
    out = np.zeros((N_CLS, N_PROMPT, SEQ_LEN, CTX_DIM), dtype=np.float32)
    for ci in range(N_CLS):
        for slot, p in enumerate(order):
            src = np.concatenate([prefix[ci], ctx[p], suffix[ci]], axis=0)
            out[ci, slot] = src[_perm_indices(int(pos[p]), int(name_lens[ci]))]
    return out.reshape(N_CLS * N_PROMPT, SEQ_LEN, CTX_DIM)


if __name__ == "__main__":
    key = jax.random.PRNGKey(0)
    k_ctx, k_pre, k_suf, k_ncp, k_ncs, k_tok, k_nctok = jax.random.split(key, 7)

    # deterministic "parameters" / buffers (shapes from __init__)
    ctx = (0.02 * jax.random.normal(k_ctx, (N_PROMPT, N_CTX, CTX_DIM))).astype(DTYPE)
    token_prefix = jax.random.normal(k_pre, (N_CLS, 1, CTX_DIM), DTYPE)
    token_suffix = jax.random.normal(k_suf, (N_CLS, SUF_LEN, CTX_DIM), DTYPE)
    nc_token_prefix = jax.random.normal(k_ncp, (1, 1, CTX_DIM), DTYPE)
    nc_token_suffix = jax.random.normal(k_ncs, (1, SUF_LEN, CTX_DIM), DTYPE)

    # pos codes as in __init__ (n_prompt > 1): quarter front, quarter middle, half end
    pos = np.array([0] * (N_PROMPT // 4) + [1] * (N_PROMPT // 4)
                   + [2] * (N_PROMPT // 2), dtype=np.int32)
    name_lens = np.array([1, 2, 3], dtype=np.int32)  # synthetic tokenizer name lengths

    # synthetic tokenized prompts (stand-in for clip.tokenize)
    tokenized_prompts = jax.random.randint(k_tok, (N_CLS, SEQ_LEN), 0, 1000, jnp.int32)
    nc_tokenized_prompts = jax.random.randint(k_nctok, (1, SEQ_LEN), 0, 1000, jnp.int32)

    # ---- forward (infer=False, n_iter == 1 deterministic branch) ----
    prompts, tok, nc_prompts, nc_tok = prompt_learner_forward(
        token_prefix, token_suffix, ctx, nc_token_prefix, nc_token_suffix,
        tokenized_prompts, nc_tokenized_prompts, pos, name_lens)
    jax.block_until_ready((prompts, tok, nc_prompts, nc_tok))

    # correctness check against a pure-numpy reference of the torch semantics
    ref = reference_prompts(ctx, pos, token_prefix, token_suffix, name_lens)
    np.testing.assert_allclose(np.asarray(prompts), ref, rtol=1e-5, atol=1e-5)

    nc_ref = np.concatenate(
        [np.tile(np.asarray(nc_token_prefix), (N_PROMPT, 1, 1)),
         np.asarray(ctx),
         np.tile(np.asarray(nc_token_suffix), (N_PROMPT, 1, 1))], axis=1)
    np.testing.assert_allclose(np.asarray(nc_prompts), nc_ref, rtol=1e-5, atol=1e-5)

    tok_ref = np.repeat(np.asarray(tokenized_prompts), N_PROMPT, axis=0)
    np.testing.assert_array_equal(np.asarray(tok), tok_ref)
    nc_tok_ref = np.tile(np.asarray(nc_tokenized_prompts), (N_PROMPT, 1))
    np.testing.assert_array_equal(np.asarray(nc_tok), nc_tok_ref)

    assert prompts.shape == (N_PROMPT * N_CLS, SEQ_LEN, CTX_DIM)
    assert tok.shape == (N_PROMPT * N_CLS, SEQ_LEN)
    assert nc_prompts.shape == (N_PROMPT, SEQ_LEN, CTX_DIM)
    assert nc_tok.shape == (N_PROMPT, SEQ_LEN)
    print("KERNEL_OK")
</pallas_src>

<mosaic_0001>
module attributes {stable_mosaic.version = 11 : i64} {
  func.func @kernel(%arg0: memref<3x1x32xf32, #tpu.memory_space<vmem>>, %arg1: memref<3x11x32xf32, #tpu.memory_space<vmem>>, %arg2: memref<4x4x32xf32, #tpu.memory_space<vmem>>, %arg3: memref<1x1x32xf32, #tpu.memory_space<vmem>>, %arg4: memref<1x11x32xf32, #tpu.memory_space<vmem>>, %arg5: memref<3x16xi32, #tpu.memory_space<vmem>>, %arg6: memref<1x16xi32, #tpu.memory_space<vmem>>, %arg7: memref<12x16x32xf32, #tpu.memory_space<vmem>>, %arg8: memref<12x16xi32, #tpu.memory_space<vmem>>, %arg9: memref<4x16x32xf32, #tpu.memory_space<vmem>>, %arg10: memref<4x16xi32, #tpu.memory_space<vmem>>) attributes {dimension_semantics = [], scalar_prefetch = 0 : i64, scratch_operands = 0 : i64, tpu.core_type = #tpu.core_type<tc>} {
    %c0 = arith.constant 0 : index
    %c0_0 = arith.constant 0 : index
    %c0_1 = arith.constant 0 : index
    %0 = vector.load %arg0[%c0, %c0_0, %c0_1] : memref<3x1x32xf32, #tpu.memory_space<vmem>>, vector<3x1x32xf32>
    %c0_2 = arith.constant 0 : index
    %c0_3 = arith.constant 0 : index
    %c0_4 = arith.constant 0 : index
    %1 = vector.load %arg1[%c0_2, %c0_3, %c0_4] : memref<3x11x32xf32, #tpu.memory_space<vmem>>, vector<3x11x32xf32>
    %c0_5 = arith.constant 0 : index
    %c0_6 = arith.constant 0 : index
    %c0_7 = arith.constant 0 : index
    %2 = vector.load %arg2[%c0_5, %c0_6, %c0_7] : memref<4x4x32xf32, #tpu.memory_space<vmem>>, vector<4x4x32xf32>
    %c0_8 = arith.constant 0 : index
    %c0_9 = arith.constant 0 : index
    %c0_10 = arith.constant 0 : index
    %3 = vector.load %arg3[%c0_8, %c0_9, %c0_10] : memref<1x1x32xf32, #tpu.memory_space<vmem>>, vector<1x1x32xf32>
    %c0_11 = arith.constant 0 : index
    %c0_12 = arith.constant 0 : index
    %c0_13 = arith.constant 0 : index
    %4 = vector.load %arg4[%c0_11, %c0_12, %c0_13] : memref<1x11x32xf32, #tpu.memory_space<vmem>>, vector<1x11x32xf32>
    %c0_14 = arith.constant 0 : index
    %c0_15 = arith.constant 0 : index
    %5 = vector.load %arg5[%c0_14, %c0_15] : memref<3x16xi32, #tpu.memory_space<vmem>>, vector<3x16xi32>
    %c0_16 = arith.constant 0 : index
    %c0_17 = arith.constant 0 : index
    %6 = vector.load %arg6[%c0_16, %c0_17] : memref<1x16xi32, #tpu.memory_space<vmem>>, vector<1x16xi32>
    %7 = vector.extract_strided_slice %0 {offsets = [0, 0, 0], sizes = [1, 1, 32], strides = [1, 1, 1]} : vector<3x1x32xf32> to vector<1x1x32xf32>
    %8 = vector.shape_cast %7 : vector<1x1x32xf32> to vector<1x32xf32>
    %9 = vector.extract_strided_slice %1 {offsets = [0, 0, 0], sizes = [1, 11, 32], strides = [1, 1, 1]} : vector<3x11x32xf32> to vector<1x11x32xf32>
    %10 = vector.shape_cast %9 : vector<1x11x32xf32> to vector<11x32xf32>
    %11 = vector.extract_strided_slice %10 {offsets = [0, 0], sizes = [1, 32], strides = [1, 1]} : vector<11x32xf32> to vector<1x32xf32>
    %12 = vector.extract_strided_slice %10 {offsets = [1, 0], sizes = [10, 32], strides = [1, 1]} : vector<11x32xf32> to vector<10x32xf32>
    %13 = vector.extract_strided_slice %2 {offsets = [2, 0, 0], sizes = [1, 4, 32], strides = [1, 1, 1]} : vector<4x4x32xf32> to vector<1x4x32xf32>
    %14 = vector.shape_cast %13 : vector<1x4x32xf32> to vector<4x32xf32>
    %15 = tpu.concatenate %8, %14, %10 in 0 : vector<1x32xf32>, vector<4x32xf32>, vector<11x32xf32> -> vector<16x32xf32>
    %c0_18 = arith.constant 0 : index
    %c0_19 = arith.constant 0 : index
    %c0_20 = arith.constant 0 : index
    %16 = vector.load %arg7[%c0_18, %c0_19, %c0_20] : memref<12x16x32xf32, #tpu.memory_space<vmem>>, vector<1x16x32xf32>
    %17 = vector.shape_cast %16 : vector<1x16x32xf32> to vector<16x32xf32>
    %18 = vector.shape_cast %15 : vector<16x32xf32> to vector<1x16x32xf32>
    tpu.vector_store %arg7[%c0_18, %c0_19, %c0_20], %18 {strides = array<i32>} : memref<12x16x32xf32, #tpu.memory_space<vmem>>, vector<1x16x32xf32>,
    %19 = vector.extract_strided_slice %2 {offsets = [3, 0, 0], sizes = [1, 4, 32], strides = [1, 1, 1]} : vector<4x4x32xf32> to vector<1x4x32xf32>
    %20 = vector.shape_cast %19 : vector<1x4x32xf32> to vector<4x32xf32>
    %21 = tpu.concatenate %8, %20, %10 in 0 : vector<1x32xf32>, vector<4x32xf32>, vector<11x32xf32> -> vector<16x32xf32>
    %c1 = arith.constant 1 : index
    %c0_21 = arith.constant 0 : index
    %c0_22 = arith.constant 0 : index
    %22 = vector.load %arg7[%c1, %c0_21, %c0_22] : memref<12x16x32xf32, #tpu.memory_space<vmem>>, vector<1x16x32xf32>
    %23 = vector.shape_cast %22 : vector<1x16x32xf32> to vector<16x32xf32>
    %24 = vector.shape_cast %21 : vector<16x32xf32> to vector<1x16x32xf32>
    tpu.vector_store %arg7[%c1, %c0_21, %c0_22], %24 {strides = array<i32>} : memref<12x16x32xf32, #tpu.memory_space<vmem>>, vector<1x16x32xf32>,
    %25 = vector.extract_strided_slice %2 {offsets = [1, 0, 0], sizes = [1, 4, 32], strides = [1, 1, 1]} : vector<4x4x32xf32> to vector<1x4x32xf32>
    %26 = vector.shape_cast %25 : vector<1x4x32xf32> to vector<4x32xf32>
    %27 = vector.extract_strided_slice %26 {offsets = [0, 0], sizes = [2, 32], strides = [1, 1]} : vector<4x32xf32> to vector<2x32xf32>
    %28 = vector.extract_strided_slice %26 {offsets = [2, 0], sizes = [2, 32], strides = [1, 1]} : vector<4x32xf32> to vector<2x32xf32>
    %29 = tpu.concatenate %8, %27, %11, %28, %12 in 0 : vector<1x32xf32>, vector<2x32xf32>, vector<1x32xf32>, vector<2x32xf32>, vector<10x32xf32> -> vector<16x32xf32>
    %c2 = arith.constant 2 : index
    %c0_23 = arith.constant 0 : index
    %c0_24 = arith.constant 0 : index
    %30 = vector.load %arg7[%c2, %c0_23, %c0_24] : memref<12x16x32xf32, #tpu.memory_space<vmem>>, vector<1x16x32xf32>
    %31 = vector.shape_cast %30 : vector<1x16x32xf32> to vector<16x32xf32>
    %32 = vector.shape_cast %29 : vector<16x32xf32> to vector<1x16x32xf32>
    tpu.vector_store %arg7[%c2, %c0_23, %c0_24], %32 {strides = array<i32>} : memref<12x16x32xf32, #tpu.memory_space<vmem>>, vector<1x16x32xf32>,
    %33 = vector.extract_strided_slice %2 {offsets = [0, 0, 0], sizes = [1, 4, 32], strides = [1, 1, 1]} : vector<4x4x32xf32> to vector<1x4x32xf32>
    %34 = vector.shape_cast %33 : vector<1x4x32xf32> to vector<4x32xf32>
    %35 = tpu.concatenate %8, %11, %34, %12 in 0 : vector<1x32xf32>, vector<1x32xf32>, vector<4x32xf32>, vector<10x32xf32> -> vector<16x32xf32>
    %c3 = arith.constant 3 : index
    %c0_25 = arith.constant 0 : index
    %c0_26 = arith.constant 0 : index
    %36 = vector.load %arg7[%c3, %c0_25, %c0_26] : memref<12x16x32xf32, #tpu.memory_space<vmem>>, vector<1x16x32xf32>
    %37 = vector.shape_cast %36 : vector<1x16x32xf32> to vector<16x32xf32>
    %38 = vector.shape_cast %35 : vector<16x32xf32> to vector<1x16x32xf32>
    tpu.vector_store %arg7[%c3, %c0_25, %c0_26], %38 {strides = array<i32>} : memref<12x16x32xf32, #tpu.memory_space<vmem>>, vector<1x16x32xf32>,
    %39 = vector.extract_strided_slice %0 {offsets = [1, 0, 0], sizes = [1, 1, 32], strides = [1, 1, 1]} : vector<3x1x32xf32> to vector<1x1x32xf32>
    %40 = vector.shape_cast %39 : vector<1x1x32xf32> to vector<1x32xf32>
    %41 = vector.extract_strided_slice %1 {offsets = [1, 0, 0], sizes = [1, 11, 32], strides = [1, 1, 1]} : vector<3x11x32xf32> to vector<1x11x32xf32>
    %42 = vector.shape_cast %41 : vector<1x11x32xf32> to vector<11x32xf32>
    %43 = vector.extract_strided_slice %42 {offsets = [0, 0], sizes = [2, 32], strides = [1, 1]} : vector<11x32xf32> to vector<2x32xf32>
    %44 = vector.extract_strided_slice %42 {offsets = [2, 0], sizes = [9, 32], strides = [1, 1]} : vector<11x32xf32> to vector<9x32xf32>
    %45 = vector.extract_strided_slice %2 {offsets = [2, 0, 0], sizes = [1, 4, 32], strides = [1, 1, 1]} : vector<4x4x32xf32> to vector<1x4x32xf32>
    %46 = vector.shape_cast %45 : vector<1x4x32xf32> to vector<4x32xf32>
    %47 = tpu.concatenate %40, %46, %42 in 0 : vector<1x32xf32>, vector<4x32xf32>, vector<11x32xf32> -> vector<16x32xf32>
    %c4 = arith.constant 4 : index
    %c0_27 = arith.constant 0 : index
    %c0_28 = arith.constant 0 : index
    %48 = vector.load %arg7[%c4, %c0_27, %c0_28] : memref<12x16x32xf32, #tpu.memory_space<vmem>>, vector<1x16x32xf32>
    %49 = vector.shape_cast %48 : vector<1x16x32xf32> to vector<16x32xf32>
    %50 = vector.shape_cast %47 : vector<16x32xf32> to vector<1x16x32xf32>
    tpu.vector_store %arg7[%c4, %c0_27, %c0_28], %50 {strides = array<i32>} : memref<12x16x32xf32, #tpu.memory_space<vmem>>, vector<1x16x32xf32>,
    %51 = vector.extract_strided_slice %2 {offsets = [3, 0, 0], sizes = [1, 4, 32], strides = [1, 1, 1]} : vector<4x4x32xf32> to vector<1x4x32xf32>
    %52 = vector.shape_cast %51 : vector<1x4x32xf32> to vector<4x32xf32>
    %53 = tpu.concatenate %40, %52, %42 in 0 : vector<1x32xf32>, vector<4x32xf32>, vector<11x32xf32> -> vector<16x32xf32>
    %c5 = arith.constant 5 : index
    %c0_29 = arith.constant 0 : index
    %c0_30 = arith.constant 0 : index
    %54 = vector.load %arg7[%c5, %c0_29, %c0_30] : memref<12x16x32xf32, #tpu.memory_space<vmem>>, vector<1x16x32xf32>
    %55 = vector.shape_cast %54 : vector<1x16x32xf32> to vector<16x32xf32>
    %56 = vector.shape_cast %53 : vector<16x32xf32> to vector<1x16x32xf32>
    tpu.vector_store %arg7[%c5, %c0_29, %c0_30], %56 {strides = array<i32>} : memref<12x16x32xf32, #tpu.memory_space<vmem>>, vector<1x16x32xf32>,
    %57 = vector.extract_strided_slice %2 {offsets = [1, 0, 0], sizes = [1, 4, 32], strides = [1, 1, 1]} : vector<4x4x32xf32> to vector<1x4x32xf32>
    %58 = vector.shape_cast %57 : vector<1x4x32xf32> to vector<4x32xf32>
    %59 = vector.extract_strided_slice %58 {offsets = [0, 0], sizes = [2, 32], strides = [1, 1]} : vector<4x32xf32> to vector<2x32xf32>
    %60 = vector.extract_strided_slice %58 {offsets = [2, 0], sizes = [2, 32], strides = [1, 1]} : vector<4x32xf32> to vector<2x32xf32>
    %61 = tpu.concatenate %40, %59, %43, %60, %44 in 0 : vector<1x32xf32>, vector<2x32xf32>, vector<2x32xf32>, vector<2x32xf32>, vector<9x32xf32> -> vector<16x32xf32>
    %c6 = arith.constant 6 : index
    %c0_31 = arith.constant 0 : index
    %c0_32 = arith.constant 0 : index
    %62 = vector.load %arg7[%c6, %c0_31, %c0_32] : memref<12x16x32xf32, #tpu.memory_space<vmem>>, vector<1x16x32xf32>
    %63 = vector.shape_cast %62 : vector<1x16x32xf32> to vector<16x32xf32>
    %64 = vector.shape_cast %61 : vector<16x32xf32> to vector<1x16x32xf32>
    tpu.vector_store %arg7[%c6, %c0_31, %c0_32], %64 {strides = array<i32>} : memref<12x16x32xf32, #tpu.memory_space<vmem>>, vector<1x16x32xf32>,
    %65 = vector.extract_strided_slice %2 {offsets = [0, 0, 0], sizes = [1, 4, 32], strides = [1, 1, 1]} : vector<4x4x32xf32> to vector<1x4x32xf32>
    %66 = vector.shape_cast %65 : vector<1x4x32xf32> to vector<4x32xf32>
    %67 = tpu.concatenate %40, %43, %66, %44 in 0 : vector<1x32xf32>, vector<2x32xf32>, vector<4x32xf32>, vector<9x32xf32> -> vector<16x32xf32>
    %c7 = arith.constant 7 : index
    %c0_33 = arith.constant 0 : index
    %c0_34 = arith.constant 0 : index
    %68 = vector.load %arg7[%c7, %c0_33, %c0_34] : memref<12x16x32xf32, #tpu.memory_space<vmem>>, vector<1x16x32xf32>
    %69 = vector.shape_cast %68 : vector<1x16x32xf32> to vector<16x32xf32>
    %70 = vector.shape_cast %67 : vector<16x32xf32> to vector<1x16x32xf32>
    tpu.vector_store %arg7[%c7, %c0_33, %c0_34], %70 {strides = array<i32>} : memref<12x16x32xf32, #tpu.memory_space<vmem>>, vector<1x16x32xf32>,
    %71 = vector.extract_strided_slice %0 {offsets = [2, 0, 0], sizes = [1, 1, 32], strides = [1, 1, 1]} : vector<3x1x32xf32> to vector<1x1x32xf32>
    %72 = vector.shape_cast %71 : vector<1x1x32xf32> to vector<1x32xf32>
    %73 = vector.extract_strided_slice %1 {offsets = [2, 0, 0], sizes = [1, 11, 32], strides = [1, 1, 1]} : vector<3x11x32xf32> to vector<1x11x32xf32>
    %74 = vector.shape_cast %73 : vector<1x11x32xf32> to vector<11x32xf32>
    %75 = vector.extract_strided_slice %74 {offsets = [0, 0], sizes = [3, 32], strides = [1, 1]} : vector<11x32xf32> to vector<3x32xf32>
    %76 = vector.extract_strided_slice %74 {offsets = [3, 0], sizes = [8, 32], strides = [1, 1]} : vector<11x32xf32> to vector<8x32xf32>
    %77 = vector.extract_strided_slice %2 {offsets = [2, 0, 0], sizes = [1, 4, 32], strides = [1, 1, 1]} : vector<4x4x32xf32> to vector<1x4x32xf32>
    %78 = vector.shape_cast %77 : vector<1x4x32xf32> to vector<4x32xf32>
    %79 = tpu.concatenate %72, %78, %74 in 0 : vector<1x32xf32>, vector<4x32xf32>, vector<11x32xf32> -> vector<16x32xf32>
    %c8 = arith.constant 8 : index
    %c0_35 = arith.constant 0 : index
    %c0_36 = arith.constant 0 : index
    %80 = vector.load %arg7[%c8, %c0_35, %c0_36] : memref<12x16x32xf32, #tpu.memory_space<vmem>>, vector<1x16x32xf32>
    %81 = vector.shape_cast %80 : vector<1x16x32xf32> to vector<16x32xf32>
    %82 = vector.shape_cast %79 : vector<16x32xf32> to vector<1x16x32xf32>
    tpu.vector_store %arg7[%c8, %c0_35, %c0_36], %82 {strides = array<i32>} : memref<12x16x32xf32, #tpu.memory_space<vmem>>, vector<1x16x32xf32>,
    %83 = vector.extract_strided_slice %2 {offsets = [3, 0, 0], sizes = [1, 4, 32], strides = [1, 1, 1]} : vector<4x4x32xf32> to vector<1x4x32xf32>
    %84 = vector.shape_cast %83 : vector<1x4x32xf32> to vector<4x32xf32>
    %85 = tpu.concatenate %72, %84, %74 in 0 : vector<1x32xf32>, vector<4x32xf32>, vector<11x32xf32> -> vector<16x32xf32>
    %c9 = arith.constant 9 : index
    %c0_37 = arith.constant 0 : index
    %c0_38 = arith.constant 0 : index
    %86 = vector.load %arg7[%c9, %c0_37, %c0_38] : memref<12x16x32xf32, #tpu.memory_space<vmem>>, vector<1x16x32xf32>
    %87 = vector.shape_cast %86 : vector<1x16x32xf32> to vector<16x32xf32>
    %88 = vector.shape_cast %85 : vector<16x32xf32> to vector<1x16x32xf32>
    tpu.vector_store %arg7[%c9, %c0_37, %c0_38], %88 {strides = array<i32>} : memref<12x16x32xf32, #tpu.memory_space<vmem>>, vector<1x16x32xf32>,
    %89 = vector.extract_strided_slice %2 {offsets = [1, 0, 0], sizes = [1, 4, 32], strides = [1, 1, 1]} : vector<4x4x32xf32> to vector<1x4x32xf32>
    %90 = vector.shape_cast %89 : vector<1x4x32xf32> to vector<4x32xf32>
    %91 = vector.extract_strided_slice %90 {offsets = [0, 0], sizes = [2, 32], strides = [1, 1]} : vector<4x32xf32> to vector<2x32xf32>
    %92 = vector.extract_strided_slice %90 {offsets = [2, 0], sizes = [2, 32], strides = [1, 1]} : vector<4x32xf32> to vector<2x32xf32>
    %93 = tpu.concatenate %72, %91, %75, %92, %76 in 0 : vector<1x32xf32>, vector<2x32xf32>, vector<3x32xf32>, vector<2x32xf32>, vector<8x32xf32> -> vector<16x32xf32>
    %c10 = arith.constant 10 : index
    %c0_39 = arith.constant 0 : index
    %c0_40 = arith.constant 0 : index
    %94 = vector.load %arg7[%c10, %c0_39, %c0_40] : memref<12x16x32xf32, #tpu.memory_space<vmem>>, vector<1x16x32xf32>
    %95 = vector.shape_cast %94 : vector<1x16x32xf32> to vector<16x32xf32>
    %96 = vector.shape_cast %93 : vector<16x32xf32> to vector<1x16x32xf32>
    tpu.vector_store %arg7[%c10, %c0_39, %c0_40], %96 {strides = array<i32>} : memref<12x16x32xf32, #tpu.memory_space<vmem>>, vector<1x16x32xf32>,
    %97 = vector.extract_strided_slice %2 {offsets = [0, 0, 0], sizes = [1, 4, 32], strides = [1, 1, 1]} : vector<4x4x32xf32> to vector<1x4x32xf32>
    %98 = vector.shape_cast %97 : vector<1x4x32xf32> to vector<4x32xf32>
    %99 = tpu.concatenate %72, %75, %98, %76 in 0 : vector<1x32xf32>, vector<3x32xf32>, vector<4x32xf32>, vector<8x32xf32> -> vector<16x32xf32>
    %c11 = arith.constant 11 : index
    %c0_41 = arith.constant 0 : index
    %c0_42 = arith.constant 0 : index
    %100 = vector.load %arg7[%c11, %c0_41, %c0_42] : memref<12x16x32xf32, #tpu.memory_space<vmem>>, vector<1x16x32xf32>
    %101 = vector.shape_cast %100 : vector<1x16x32xf32> to vector<16x32xf32>
    %102 = vector.shape_cast %99 : vector<16x32xf32> to vector<1x16x32xf32>
    tpu.vector_store %arg7[%c11, %c0_41, %c0_42], %102 {strides = array<i32>} : memref<12x16x32xf32, #tpu.memory_space<vmem>>, vector<1x16x32xf32>,
    %103 = vector.extract_strided_slice %5 {offsets = [0, 0], sizes = [1, 16], strides = [1, 1]} : vector<3x16xi32> to vector<1x16xi32>
    %104 = vector.shape_cast %103 : vector<1x16xi32> to vector<1x16xi32>
    %105 = vector.broadcast %104 : vector<1x16xi32> to vector<4x16xi32>
    %c0_43 = arith.constant 0 : index
    %c0_44 = arith.constant 0 : index
    %106 = vector.load %arg8[%c0_43, %c0_44] : memref<12x16xi32, #tpu.memory_space<vmem>>, vector<4x16xi32>
    tpu.vector_store %arg8[%c0_43, %c0_44], %105 {strides = array<i32>} : memref<12x16xi32, #tpu.memory_space<vmem>>, vector<4x16xi32>,
    %107 = vector.extract_strided_slice %5 {offsets = [1, 0], sizes = [1, 16], strides = [1, 1]} : vector<3x16xi32> to vector<1x16xi32>
    %108 = vector.shape_cast %107 : vector<1x16xi32> to vector<1x16xi32>
    %109 = vector.broadcast %108 : vector<1x16xi32> to vector<4x16xi32>
    %c4_45 = arith.constant 4 : index
    %c0_46 = arith.constant 0 : index
    %110 = vector.load %arg8[%c4_45, %c0_46] : memref<12x16xi32, #tpu.memory_space<vmem>>, vector<4x16xi32>
    tpu.vector_store %arg8[%c4_45, %c0_46], %109 {strides = array<i32>} : memref<12x16xi32, #tpu.memory_space<vmem>>, vector<4x16xi32>,
    %111 = vector.extract_strided_slice %5 {offsets = [2, 0], sizes = [1, 16], strides = [1, 1]} : vector<3x16xi32> to vector<1x16xi32>
    %112 = vector.shape_cast %111 : vector<1x16xi32> to vector<1x16xi32>
    %113 = vector.broadcast %112 : vector<1x16xi32> to vector<4x16xi32>
    %c8_47 = arith.constant 8 : index
    %c0_48 = arith.constant 0 : index
    %114 = vector.load %arg8[%c8_47, %c0_48] : memref<12x16xi32, #tpu.memory_space<vmem>>, vector<4x16xi32>
    tpu.vector_store %arg8[%c8_47, %c0_48], %113 {strides = array<i32>} : memref<12x16xi32, #tpu.memory_space<vmem>>, vector<4x16xi32>,
    %115 = vector.shape_cast %6 : vector<1x16xi32> to vector<1x16xi32>
    %116 = vector.broadcast %115 : vector<1x16xi32> to vector<4x16xi32>
    %c0_49 = arith.constant 0 : index
    %c0_50 = arith.constant 0 : index
    %117 = vector.load %arg10[%c0_49, %c0_50] : memref<4x16xi32, #tpu.memory_space<vmem>>, vector<4x16xi32>
    tpu.vector_store %arg10[%c0_49, %c0_50], %116 {strides = array<i32>} : memref<4x16xi32, #tpu.memory_space<vmem>>, vector<4x16xi32>,
    %118 = vector.shape_cast %3 : vector<1x1x32xf32> to vector<1x1x32xf32>
    %119 = vector.broadcast %118 : vector<1x1x32xf32> to vector<4x1x32xf32>
    %c0_51 = arith.constant 0 : index
    %c0_52 = arith.constant 0 : index
    %c0_53 = arith.constant 0 : index
    %120 = vector.load %arg9[%c0_51, %c0_52, %c0_53] : memref<4x16x32xf32, #tpu.memory_space<vmem>>, vector<4x1x32xf32>
    tpu.vector_store %arg9[%c0_51, %c0_52, %c0_53], %119 {strides = array<i32>} : memref<4x16x32xf32, #tpu.memory_space<vmem>>, vector<4x1x32xf32>,
    %c0_54 = arith.constant 0 : index
    %c1_55 = arith.constant 1 : index
    %c0_56 = arith.constant 0 : index
    %121 = vector.load %arg9[%c0_54, %c1_55, %c0_56] : memref<4x16x32xf32, #tpu.memory_space<vmem>>, vector<4x4x32xf32>
    tpu.vector_store %arg9[%c0_54, %c1_55, %c0_56], %2 {strides = array<i32>} : memref<4x16x32xf32, #tpu.memory_space<vmem>>, vector<4x4x32xf32>,
    %122 = vector.shape_cast %4 : vector<1x11x32xf32> to vector<1x11x32xf32>
    %123 = vector.broadcast %122 : vector<1x11x32xf32> to vector<4x11x32xf32>
    %c0_57 = arith.constant 0 : index
    %c5_58 = arith.constant 5 : index
    %c0_59 = arith.constant 0 : index
    %124 = vector.load %arg9[%c0_57, %c5_58, %c0_59] : memref<4x16x32xf32, #tpu.memory_space<vmem>>, vector<4x11x32xf32>
    tpu.vector_store %arg9[%c0_57, %c5_58, %c0_59], %123 {strides = array<i32>} : memref<4x16x32xf32, #tpu.memory_space<vmem>>, vector<4x11x32xf32>,
    return
  }
}

</mosaic_0001>

<llo_original>
// kernel: tpu_custom_call.1
$region0: #{tpu_custom_call.1}
  #allocation0 [shape = 'u32[]', space=smem, size = 0x4, offset = 0x4, fixed_abs, tag = 'smem constant byte address 0x4 - core index']
  #allocation1 [shape = 'u32[72,128]{1,0:T(1,128)}', space=vmem, size = 0x9000, scoped, tag = 'internal scratch']
  %s0 = inlined_call_operand.vmem [shape: f32[3,1,32], index: 0, kind: input, shape index: {}]
  %s1 = inlined_call_operand.vmem [shape: f32[3,11,32], index: 1, kind: input, shape index: {}]
  %s2 = inlined_call_operand.vmem [shape: f32[4,4,32], index: 2, kind: input, shape index: {}]
  %s3 = inlined_call_operand.vmem [shape: f32[1,1,32], index: 3, kind: input, shape index: {}]
  %s4 = inlined_call_operand.vmem [shape: f32[1,11,32], index: 4, kind: input, shape index: {}]
  %s5 = inlined_call_operand.vmem [shape: s32[3,16], index: 5, kind: input, shape index: {}]
  %s6 = inlined_call_operand.vmem [shape: s32[1,16], index: 6, kind: input, shape index: {}]
  %s7 = inlined_call_operand.hbm [shape: f32[12,16,32], index: 7, kind: output, shape index: {0}]
  %s8 = inlined_call_operand.hbm [shape: s32[12,16], index: 8, kind: output, shape index: {1}]
  %s9 = inlined_call_operand.hbm [shape: f32[4,16,32], index: 9, kind: output, shape index: {2}]
  %s10 = inlined_call_operand.hbm [shape: s32[4,16], index: 10, kind: output, shape index: {3}]
  %11 = xla_tuple %s7, %s8, %s9, %s10
  %s12 = sld [smem:[#allocation0]]
  $region62: #{tpu_custom_call.1} parent=0
    _
  %s14 = ssub.s32 1, %s12
  %s15 = scalar_select 0, %s14, %s12
  $region1: #{tpu_custom_call.1} parent=0
    #allocation2 [shape = 'u8[98304]{0}', space=vmem, size = 0x18000, scoped, tag = 'output window, operand 0, single buffered']
    #allocation3 [shape = 's32[1]{0}', space=sflag, size = 0x4, scoped, tag = 'scoped memory for tpu_custom_call.1']
    #allocation4 [shape = 'u8[8192]{0}', space=vmem, size = 0x2000, scoped, tag = 'output window, operand 1, single buffered']
    #allocation5 [shape = 's32[1]{0}', space=sflag, size = 0x4, scoped, tag = 'scoped memory for tpu_custom_call.1']
    #allocation6 [shape = 'u8[32768]{0}', space=vmem, size = 0x8000, scoped, tag = 'output window, operand 2, single buffered']
    #allocation7 [shape = 'u8[2048]{0}', space=vmem, size = 0x800, scoped, tag = 'output window, operand 3, single buffered']
    #allocation8 [shape = 's32[1]{0}', space=sflag, size = 0x4, scoped, tag = 'scoped memory for tpu_custom_call.1']
    %16 = vsyncpa [#allocation3], 0
    %17 = vsyncpa [#allocation5], 0
    %18 = vsyncpa [#allocation8], 0
    // Predicated region
    $region2: #{tpu_custom_call.1} parent=1 // pred_check
      _
    $region3: #{tpu_custom_call.1} parent=1 // pred_check_branch
      %20 = sbr.rel (0) target = $region5
    $region4: #{tpu_custom_call.1} parent=1 // pred_region
      _
    $region5: #{tpu_custom_call.1} parent=1 // pred_fallthru
      _
    // Predicated region
    $region6: #{tpu_custom_call.1} parent=1 // pred_check
      _
    $region7: #{tpu_custom_call.1} parent=1 // pred_check_branch
      %22 = sbr.rel (0) target = $region9
    $region8: #{tpu_custom_call.1} parent=1 // pred_region
      _
    $region9: #{tpu_custom_call.1} parent=1 // pred_fallthru
      _
    // Predicated region
    $region10: #{tpu_custom_call.1} parent=1 // pred_check
      _
    $region11: #{tpu_custom_call.1} parent=1 // pred_check_branch
      %24 = sbr.rel (0) target = $region13
    $region12: #{tpu_custom_call.1} parent=1 // pred_region
      _
    $region13: #{tpu_custom_call.1} parent=1 // pred_fallthru
      _
    // Predicated region
    $region14: #{tpu_custom_call.1} parent=1 // pred_check
      _
    $region15: #{tpu_custom_call.1} parent=1 // pred_check_branch
      %26 = sbr.rel (0) target = $region17
    $region16: #{tpu_custom_call.1} parent=1 // pred_region
      _
    $region17: #{tpu_custom_call.1} parent=1 // pred_fallthru
      _
    // Predicated region
    $region18: #{tpu_custom_call.1} parent=1 // pred_check
      _
    $region19: #{tpu_custom_call.1} parent=1 // pred_check_branch
      %28 = sbr.rel (0) target = $region21
    $region20: #{tpu_custom_call.1} parent=1 // pred_region
      _
    $region21: #{tpu_custom_call.1} parent=1 // pred_fallthru
      _
    // Predicated region
    $region22: #{tpu_custom_call.1} parent=1 // pred_check
      _
    $region23: #{tpu_custom_call.1} parent=1 // pred_check_branch
      %30 = sbr.rel (0) target = $region25
    $region24: #{tpu_custom_call.1} parent=1 // pred_region
      _
    $region25: #{tpu_custom_call.1} parent=1 // pred_fallthru
      _
    // Predicated region
    $region26: #{tpu_custom_call.1} parent=1 // pred_check
      _
    $region27: #{tpu_custom_call.1} parent=1 // pred_check_branch
      %32 = sbr.rel (0) target = $region29
    $region28: #{tpu_custom_call.1} parent=1 // pred_region
      _
    $region29: #{tpu_custom_call.1} parent=1 // pred_fallthru
      _
    %v33 = vld [vmem:[%s0] sm:$0x1]
    %v34 = vld [vmem:[%s0 + $0x1] sm:$0x1]
    %v35 = vld [vmem:[%s0 + $0x2] sm:$0x1]
    %v36 = vld [vmem:[%s1] sm:$0xff]
    %v37 = vld [vmem:[%s1 + $0x8] sm:$0x7]
    %v38 = vld [vmem:[%s1 + $0x10] sm:$0xff]
    %v39 = vld [vmem:[%s1 + $0x18] sm:$0x7]
    %v40 = vld [vmem:[%s1 + $0x20] sm:$0xff]
    %v41 = vld [vmem:[%s1 + $0x28] sm:$0x7]
    %v42 = vld [vmem:[%s2] sm:$0xf]
    %v43 = vld [vmem:[%s2 + $0x4] sm:$0xf]
    %v44 = vld [vmem:[%s2 + $0x8] sm:$0xf]
    %v45 = vld [vmem:[%s2 + $0xc] sm:$0xf]
    %v46 = vld [vmem:[%s3] sm:$0x1]
    %v47 = vld [vmem:[%s4] sm:$0xff]
    %v48 = vld [vmem:[%s4 + $0x8] sm:$0x7]
    %v49 = vld [vmem:[%s5] sm:$0x7]
    %v50 = vld [vmem:[%s6] sm:$0x1]
    %v52 = vrot.slane %v44, 7
    %vm56 = vcmask 1044480
    %v57 = vrot.slane %v36, 3
    %v58 = vrot.slane %v37, 3
    %v59 = vsel %vm56, %v57, %v58
    %vm62 = vcmask 1040384
    %v63 = vsel %vm62, %v33, %v52
    %v64 = vsel %vm56, %v63, %v57
    %vm65 = vcmask 261120
    %66 = vst.msk [vmem:[#allocation2] sm:$0xff] %vm65, %v64
    %67 = vst.msk [vmem:[#allocation2 + $0x8] sm:$0xff] %vm65, %v59
    %v69 = vrot.slane %v45, 7
    %v71 = vsel %vm62, %v33, %v69
    %v72 = vsel %vm56, %v71, %v57
    %s73 = scalar_lea.vmem [#allocation2], 16
    %74 = vst.msk [vmem:[%s73] sm:$0xff] %vm65, %v72
    %75 = vst.msk [vmem:[%s73 + $0x8] sm:$0xff] %vm65, %v59
    %v77 = vrot.slane %v43, 7
    %v79 = vrot.slane %v36, 5
    %v81 = vrot.slane %v43, 6
    %v83 = vsel %vm62, %v33, %v77
    %vm84 = vcmask 1042432
    %v85 = vsel %vm84, %v83, %v79
    %vm86 = vcmask 1043456
    %v87 = vsel %vm86, %v85, %v81
    %vm88 = vcmask 1045504
    %v89 = vsel %vm88, %v87, %v57
    %s90 = scalar_lea.vmem [#allocation2], 32
    %91 = vst.msk [vmem:[%s90] sm:$0xff] %vm65, %v89
    %92 = vst.msk [vmem:[%s90 + $0x8] sm:$0xff] %vm65, %v59
    %v93 = vrot.slane %v36, 7
    %v96 = vrot.slane %v42, 6
    %v98 = vsel %vm62, %v33, %v93
    %vm99 = vcmask 1041408
    %v100 = vsel %vm99, %v98, %v96
    %v101 = vsel %vm88, %v100, %v57
    %s102 = scalar_lea.vmem [#allocation2], 48
    %103 = vst.msk [vmem:[%s102] sm:$0xff] %vm65, %v101
    %104 = vst.msk [vmem:[%s102 + $0x8] sm:$0xff] %vm65, %v59
    %v107 = vrot.slane %v38, 3
    %v108 = vrot.slane %v39, 3
    %v109 = vsel %vm56, %v107, %v108
    %v112 = vsel %vm62, %v34, %v52
    %v113 = vsel %vm56, %v112, %v107
    %s114 = scalar_lea.vmem [#allocation2], 64
    %115 = vst.msk [vmem:[%s114] sm:$0xff] %vm65, %v113
    %116 = vst.msk [vmem:[%s114 + $0x8] sm:$0xff] %vm65, %v109
    %v117 = vsel %vm62, %v34, %v69
    %v118 = vsel %vm56, %v117, %v107
    %s119 = scalar_lea.vmem [#allocation2], 80
    %120 = vst.msk [vmem:[%s119] sm:$0xff] %vm65, %v118
    %121 = vst.msk [vmem:[%s119 + $0x8] sm:$0xff] %vm65, %v109
    %v122 = vrot.slane %v38, 5
    %v124 = vrot.slane %v43, 5
    %v126 = vsel %vm62, %v34, %v77
    %v127 = vsel %vm84, %v126, %v122
    %v128 = vsel %vm56, %v127, %v124
    %vm129 = vcmask 1046528
    %v130 = vsel %vm129, %v128, %v107
    %s131 = scalar_lea.vmem [#allocation2], 96
    %132 = vst.msk [vmem:[%s131] sm:$0xff] %vm65, %v130
    %133 = vst.msk [vmem:[%s131 + $0x8] sm:$0xff] %vm65, %v109
    %v134 = vrot.slane %v38, 7
    %v136 = vrot.slane %v42, 5
    %v138 = vsel %vm62, %v34, %v134
    %v139 = vsel %vm84, %v138, %v136
    %v140 = vsel %vm129, %v139, %v107
    %s141 = scalar_lea.vmem [#allocation2], 112
    %142 = vst.msk [vmem:[%s141] sm:$0xff] %vm65, %v140
    %143 = vst.msk [vmem:[%s141 + $0x8] sm:$0xff] %vm65, %v109
    %v146 = vrot.slane %v40, 3
    %v147 = vrot.slane %v41, 3
    %v148 = vsel %vm56, %v146, %v147
    %v151 = vsel %vm62, %v35, %v52
    %v152 = vsel %vm56, %v151, %v146
    %s153 = scalar_lea.vmem [#allocation2], 128
    %154 = vst.msk [vmem:[%s153] sm:$0xff] %vm65, %v152
    %155 = vst.msk [vmem:[%s153 + $0x8] sm:$0xff] %vm65, %v148
    %v156 = vsel %vm62, %v35, %v69
    %v157 = vsel %vm56, %v156, %v146
    %s158 = scalar_lea.vmem [#allocation2], 144
    %159 = vst.msk [vmem:[%s158] sm:$0xff] %vm65, %v157
    %160 = vst.msk [vmem:[%s158 + $0x8] sm:$0xff] %vm65, %v148
    %v161 = vrot.slane %v40, 5
    %v163 = vrot.slane %v43, 4
    %v165 = vsel %vm62, %v35, %v77
    %v166 = vsel %vm84, %v165, %v161
    %v167 = vsel %vm88, %v166, %v163
    %s168 = scalar_lea.vmem [#allocation2], 160
    %169 = vst.msk [vmem:[%s168] sm:$0xff] %vm65, %v167
    %170 = vst.msk [vmem:[%s168 + $0x8] sm:$0xff] %vm65, %v148
    %v171 = vrot.slane %v40, 7
    %v173 = vrot.slane %v42, 4
    %v175 = vsel %vm62, %v35, %v171
    %v176 = vsel %vm86, %v175, %v173
    %s177 = scalar_lea.vmem [#allocation2], 176
    %178 = vst.msk [vmem:[%s177] sm:$0xff] %vm65, %v176
    %179 = vst.msk [vmem:[%s177 + $0x8] sm:$0xff] %vm65, %v148
    %v180 = vperm.slane %v49, 0
    %vm181 = vcmask 125952
    %182 = vst.msk [vmem:[#allocation4] sm:$0xf] %vm181, %v180
    %v183 = vperm.slane %v49, 1
    %184 = vst.msk [vmem:[#allocation4 + $0x4] sm:$0xf] %vm181, %v183
    %v185 = vperm.slane %v49, 2
    %186 = vst.msk [vmem:[#allocation4 + $0x8] sm:$0xf] %vm181, %v185
    %v187 = vperm.slane %v50, 0
    %188 = vst.msk [vmem:[#allocation7] sm:$0xf] %vm181, %v187
    %vm189 = vcmask 253952
    %190 = vst.msk [vmem:[#allocation6] sm:$0x1] %vm189, %v46
    %191 = vst.msk [vmem:[#allocation6 + $0x10] sm:$0x1] %vm189, %v46
    %192 = vst.msk [vmem:[#allocation6 + $0x20] sm:$0x1] %vm189, %v46
    %193 = vst.msk [vmem:[#allocation6 + $0x30] sm:$0x1] %vm189, %v46
    %vm194 = vcmask 257024
    %195 = vst.msk [vmem:[#allocation6 + $0x1] sm:$0xf] %vm194, %v42
    %196 = vst.msk [vmem:[#allocation6 + $0x11] sm:$0xf] %vm194, %v43
    %197 = vst.msk [vmem:[#allocation6 + $0x21] sm:$0xf] %vm194, %v44
    %198 = vst.msk [vmem:[#allocation6 + $0x31] sm:$0xf] %vm194, %v45
    %199 = vst.msk [vmem:[#allocation6 + $0x5] sm:$0xff] %vm65, %v47
    %vm200 = vcmask 256000
    %201 = vst.msk [vmem:[#allocation6 + $0xd] sm:$0x7] %vm200, %v48
    %202 = vst.msk [vmem:[#allocation6 + $0x15] sm:$0xff] %vm65, %v47
    %203 = vst.msk [vmem:[#allocation6 + $0x1d] sm:$0x7] %vm200, %v48
    %204 = vst.msk [vmem:[#allocation6 + $0x25] sm:$0xff] %vm65, %v47
    %205 = vst.msk [vmem:[#allocation6 + $0x2d] sm:$0x7] %vm200, %v48
    %206 = vst.msk [vmem:[#allocation6 + $0x35] sm:$0xff] %vm65, %v47
    %207 = vst.msk [vmem:[#allocation6 + $0x3d] sm:$0x7] %vm200, %v48
    // Predicated region
    $region30: #{tpu_custom_call.1} parent=1 // pred_check
      _
    $region31: #{tpu_custom_call.1} parent=1 // pred_check_branch
      %209 = sbr.rel (0) target = $region33
    $region32: #{tpu_custom_call.1} parent=1 // pred_region
      %211 = vsyncadd [#allocation3], 0
      %s212 = sshll.u32 [#allocation2], 4
      %s213 = int_to_ptr.vmem [resolvable:$true] %s212
      %s214 = sshll.u32 %s7, 4
      %s215 = int_to_ptr.hbm [resolvable:$true] %s214
      %220 = dma.vmem_to_hbm [thread:$0]  %s213, 3072, %s215, [#allocation3], 128, 128, 8
    $region33: #{tpu_custom_call.1} parent=1 // pred_fallthru
      _
    // Predicated region
    $region34: #{tpu_custom_call.1} parent=1 // pred_check
      _
    $region35: #{tpu_custom_call.1} parent=1 // pred_check_branch
      %222 = sbr.rel (0) target = $region37
    $region36: #{tpu_custom_call.1} parent=1 // pred_region
      %224 = vsyncadd [#allocation5], 0
      %s225 = sshll.u32 [#allocation4], 4
      %s226 = int_to_ptr.vmem [resolvable:$true] %s225
      %s227 = sshll.u32 %s8, 4
      %s228 = int_to_ptr.hbm [resolvable:$true] %s227
      %233 = dma.vmem_to_hbm [thread:$0]  %s226, 256, %s228, [#allocation5], 128, 128, 8
    $region37: #{tpu_custom_call.1} parent=1 // pred_fallthru
      _
    // Predicated region
    $region38: #{tpu_custom_call.1} parent=1 // pred_check
      _
    $region39: #{tpu_custom_call.1} parent=1 // pred_check_branch
      %235 = sbr.rel (0) target = $region41
    $region40: #{tpu_custom_call.1} parent=1 // pred_region
      %237 = vsyncadd [#allocation5], 0
      %s238 = sshll.u32 [#allocation6], 4
      %s239 = int_to_ptr.vmem [resolvable:$true] %s238
      %s240 = sshll.u32 %s9, 4
      %s241 = int_to_ptr.hbm [resolvable:$true] %s240
      %246 = dma.vmem_to_hbm [thread:$0]  %s239, 1024, %s241, [#allocation5], 128, 128, 8
    $region41: #{tpu_custom_call.1} parent=1 // pred_fallthru
      _
    // Predicated region
    $region42: #{tpu_custom_call.1} parent=1 // pred_check
      _
    $region43: #{tpu_custom_call.1} parent=1 // pred_check_branch
      %248 = sbr.rel (0) target = $region45
    $region44: #{tpu_custom_call.1} parent=1 // pred_region
      %250 = vsyncadd [#allocation8], 0
      %s252 = sshll.u32 [#allocation7], 4
      %s253 = int_to_ptr.vmem [resolvable:$true] %s252
      %s254 = sshll.u32 %s10, 4
      %s255 = int_to_ptr.hbm [resolvable:$true] %s254
      %257 = dma.vmem_to_hbm [thread:$0]  %s253, 64, %s255, [#allocation8]
    $region45: #{tpu_custom_call.1} parent=1 // pred_fallthru
      _
    // Predicated region
    $region46: #{tpu_custom_call.1} parent=1 // pred_check
      _
    $region47: #{tpu_custom_call.1} parent=1 // pred_check_branch
      %259 = sbr.rel (0) target = $region49
    $region48: #{tpu_custom_call.1} parent=1 // pred_region
      %261 = dma.done [#allocation3], 3072
    $region49: #{tpu_custom_call.1} parent=1 // pred_fallthru
      _
    // Predicated region
    $region50: #{tpu_custom_call.1} parent=1 // pred_check
      _
    $region51: #{tpu_custom_call.1} parent=1 // pred_check_branch
      %263 = sbr.rel (0) target = $region53
    $region52: #{tpu_custom_call.1} parent=1 // pred_region
      %265 = dma.done [#allocation5], 256
    $region53: #{tpu_custom_call.1} parent=1 // pred_fallthru
      _
    // Predicated region
    $region54: #{tpu_custom_call.1} parent=1 // pred_check
      _
    $region55: #{tpu_custom_call.1} parent=1 // pred_check_branch
      %267 = sbr.rel (0) target = $region57
    $region56: #{tpu_custom_call.1} parent=1 // pred_region
      %269 = dma.done [#allocation5], 1024
    $region57: #{tpu_custom_call.1} parent=1 // pred_fallthru
      _
    // Predicated region
    $region58: #{tpu_custom_call.1} parent=1 // pred_check
      _
    $region59: #{tpu_custom_call.1} parent=1 // pred_check_branch
      %271 = sbr.rel (0) target = $region61
    $region60: #{tpu_custom_call.1} parent=1 // pred_region
      %273 = dma.done [#allocation8], 64
    $region61: #{tpu_custom_call.1} parent=1 // pred_fallthru
      _
    %274 = vsyncpa [#allocation3], 1
    %275 = vsyncpa [#allocation5], 1
    %276 = vsyncpa [#allocation8], 1

</llo_original>
